<compile_context>
chip_gen: v6e
topology: v6e:2x2x1
jax: 0.10.0
libtpu: 0.0.40
codegen_flags: <defaults>
</compile_context>

<pallas_src>
import jax
import jax.numpy as jnp
from jax.experimental import pallas as pl
from jax.experimental.pallas import tpu as pltpu

_LANES = 128
_MIN_BLOCK_BYTES = 1 * 1024 * 1024
_MAX_BLOCK_BYTES = 8 * 1024 * 1024  # f32: tr = 16384 rows per block

# Minimum sublane tiling per dtype width: (8,128) f32, (16,128) bf16, (32,128) int8/fp8.
_SUBLANE = {4: 8, 2: 16, 1: 32}


def _max_kernel(a_ref, b_ref, o_ref):
    # Elementwise max over the whole VMEM tile (VPU).
    o_ref[...] = jnp.maximum(a_ref[...], b_ref[...])


def _tpu_budget():
    """Generation-aware (target_block_bytes, vmem_limit_bytes, num_cores)."""
    vmem_bytes = 64 * 1024 * 1024  # conservative default: v7x per-TC physical VMEM
    num_cores = 1
    try:
        info = pltpu.get_tpu_info()
        vmem_bytes = int(getattr(info, "vmem_capacity_bytes", vmem_bytes))
        for attr in ("num_cores", "core_count", "num_tensorcores", "tensorcore_count"):
            val = getattr(info, attr, None)
            if val:
                num_cores = int(val)
                break
    except Exception:
        pass
    # 3 arrays x 2 pipeline buffers per block live at once; keep ~25% VMEM headroom.
    target_block = min(_MAX_BLOCK_BYTES,
                       max(_MIN_BLOCK_BYTES, (vmem_bytes * 3 // 4) // 6))
    # v7x: 64 MiB physical -> 8 MiB blocks, 56 MiB scoped limit.
    # v5e/v6e: 128 MiB physical -> 8 MiB blocks, 56 MiB scoped limit (plenty of slack).
    vmem_limit = min(vmem_bytes, 6 * target_block + 8 * 1024 * 1024)
    return target_block, vmem_limit, num_cores


def _pick_tile_rows(rows, sub, target_rows, num_cores):
    """Sublane-aligned row tile; grid uses cdiv so the trailing block is masked."""
    if rows <= target_rows:
        if num_cores > 1 and rows > num_cores * sub:
            # Split medium inputs so every TensorCore gets a block (v7x megacore).
            tr = ((pl.cdiv(rows, num_cores) + sub - 1) // sub) * sub
            return min(tr, rows)
        # Single full-extent block (always a legal block shape); avoids paying the
        # per-step overhead twice on single-core chips (v5e/v6e).
        return rows
    return target_rows


def max_interpolate(im0, im1):
    """Elementwise maximum of two same-shaped arrays via a Pallas TPU kernel."""
    assert im0.shape == im1.shape and im0.dtype == im1.dtype
    orig_shape = im0.shape
    total = im0.size
    itemsize = jnp.dtype(im0.dtype).itemsize

    if total == 0 or itemsize not in _SUBLANE:
        # Empty input or element width without a known sublane tiling (e.g. f64):
        # the fused XLA elementwise max is both correct and optimal here.
        return jnp.maximum(im0, im1)

    sub = _SUBLANE[itemsize]
    rows = total // _LANES
    tail = total % _LANES

    if rows == 0:
        # Fewer than 128 elements: a kernel launch is pure overhead.
        return jnp.maximum(im0, im1)

    if tail == 0:
        # Common case (image tensors): reshape is a free bitcast, no extra HBM pass.
        a = im0.reshape(rows, _LANES)
        b = im1.reshape(rows, _LANES)
    else:
        # Ragged case: run the kernel on the 128-aligned prefix and compute the
        # <128-element tail with a plain fused max (no jnp.pad round-trips).
        # TODO(synk): a masked in-kernel tail store (memory_space=pl.ANY) would
        # avoid the prefix-slice copies entirely.
        flat0 = im0.reshape(-1)
        flat1 = im1.reshape(-1)
        a = flat0[: rows * _LANES].reshape(rows, _LANES)
        b = flat1[: rows * _LANES].reshape(rows, _LANES)

    target_bytes, vmem_limit, num_cores = _tpu_budget()
    # Dtype-aware block: constant byte-size regardless of element width.
    target_rows = max(sub, (target_bytes // (_LANES * itemsize)) // sub * sub)
    tr = _pick_tile_rows(rows, sub, target_rows, num_cores)
    grid = (pl.cdiv(rows, tr),)  # partial trailing block is masked by Pallas

    out = pl.pallas_call(
        _max_kernel,
        out_shape=jax.ShapeDtypeStruct((rows, _LANES), im0.dtype),
        grid_spec=pltpu.PrefetchScalarGridSpec(
            num_scalar_prefetch=0,
            grid=grid,
            in_specs=[
                pl.BlockSpec((tr, _LANES), lambda i: (i, 0)),
                pl.BlockSpec((tr, _LANES), lambda i: (i, 0)),
            ],
            out_specs=pl.BlockSpec((tr, _LANES), lambda i: (i, 0)),
        ),
        compiler_params=pltpu.CompilerParams(
            dimension_semantics=("parallel",),
            vmem_limit_bytes=vmem_limit,
        ),
        cost_estimate=pl.CostEstimate(
            flops=rows * _LANES,
            transcendentals=0,
            bytes_accessed=3 * rows * _LANES * itemsize,
        ),
    )(a, b)

    if tail == 0:
        return out.reshape(orig_shape)
    tail_out = jnp.maximum(flat0[rows * _LANES:], flat1[rows * _LANES:])
    return jnp.concatenate([out.reshape(-1), tail_out]).reshape(orig_shape)


if __name__ == "__main__":
    key = jax.random.PRNGKey(0)
    k0, k1, k2, k3 = jax.random.split(key, 4)

    # Small NCHW inputs consistent with the module: batch=2, channels=4, 16x16 spatial.
    im0 = jax.random.normal(k0, (2, 4, 16, 16), dtype=jnp.float32)
    im1 = jax.random.normal(k1, (2, 4, 16, 16), dtype=jnp.float32)
    out = max_interpolate(im0, im1)
    jax.block_until_ready(out)
    ref = jnp.maximum(im0, im1)  # == torch.stack([im0, im1], 0).max(0)[0]
    assert out.shape == ref.shape
    assert jnp.allclose(out, ref), "mismatch vs reference (aligned shape)"

    # Exercise the ragged-tail path as well (650 elements = 5*128 + 10).
    r0 = jax.random.normal(k2, (5, 130), dtype=jnp.float32)
    r1 = jax.random.normal(k3, (5, 130), dtype=jnp.float32)
    rout = max_interpolate(r0, r1)
    jax.block_until_ready(rout)
    assert jnp.allclose(rout, jnp.maximum(r0, r1)), "mismatch vs reference (ragged shape)"

    print("KERNEL_OK")
</pallas_src>

<mosaic_0001>
module attributes {stable_mosaic.version = 11 : i64} {
  func.func @_max_kernel(%arg0: i32, %arg1: memref<16x128xf32, #tpu.memory_space<vmem>>, %arg2: memref<16x128xf32, #tpu.memory_space<vmem>>, %arg3: memref<16x128xf32, #tpu.memory_space<vmem>>) attributes {dimension_semantics = [#tpu.dimension_semantics<parallel>], iteration_bounds = array<i64: 1>, scalar_prefetch = 0 : i64, scratch_operands = 0 : i64, tpu.core_type = #tpu.core_type<tc>, window_params = [{transform_indices = @transform_0, window_bounds = array<i64: 16, 128>}, {transform_indices = @transform_1, window_bounds = array<i64: 16, 128>}, {transform_indices = @transform_2, window_bounds = array<i64: 16, 128>}]} {
    %c0 = arith.constant 0 : index
    %c0_0 = arith.constant 0 : index
    %0 = vector.load %arg1[%c0, %c0_0] : memref<16x128xf32, #tpu.memory_space<vmem>>, vector<16x128xf32>
    %c0_1 = arith.constant 0 : index
    %c0_2 = arith.constant 0 : index
    %1 = vector.load %arg2[%c0_1, %c0_2] : memref<16x128xf32, #tpu.memory_space<vmem>>, vector<16x128xf32>
    %2 = arith.maximumf %0, %1 : vector<16x128xf32>
    %c0_3 = arith.constant 0 : index
    %c0_4 = arith.constant 0 : index
    %3 = vector.load %arg3[%c0_3, %c0_4] : memref<16x128xf32, #tpu.memory_space<vmem>>, vector<16x128xf32>
    tpu.vector_store %arg3[%c0_3, %c0_4], %2 {strides = array<i32>} : memref<16x128xf32, #tpu.memory_space<vmem>>, vector<16x128xf32>,
    return
  }
  func.func @transform_0(%arg0: i32) -> (i32, i32) {
    %c0_i32 = arith.constant 0 : i32
    %c0_i32_0 = arith.constant 0 : i32
    return %arg0, %c0_i32 : i32, i32
  }
  func.func @transform_1(%arg0: i32) -> (i32, i32) {
    %c0_i32 = arith.constant 0 : i32
    %c0_i32_0 = arith.constant 0 : i32
    return %arg0, %c0_i32 : i32, i32
  }
  func.func @transform_2(%arg0: i32) -> (i32, i32) {
    %c0_i32 = arith.constant 0 : i32
    %c0_i32_0 = arith.constant 0 : i32
    return %arg0, %c0_i32 : i32, i32
  }
}

</mosaic_0001>

<llo_original>
// kernel: tpu_custom_call.1
$region0: #{tpu_custom_call.1}
  #allocation0 [shape = 'u32[]', space=smem, size = 0x4, offset = 0x4, fixed_abs, tag = 'smem constant byte address 0x4 - core index']
  #allocation1 [shape = 'u32[144,128]{1,0:T(1,128)}', space=vmem, size = 0x12000, scoped, tag = 'internal scratch']
  %s0 = inlined_call_operand.hbm [shape: f32[16,128], index: 0, kind: input, shape index: {}]
  %s1 = inlined_call_operand.hbm [shape: f32[16,128], index: 1, kind: input, shape index: {}]
  %s2 = inlined_call_operand.hbm [shape: f32[16,128], index: 2, kind: output, shape index: {}]
  %s3 = sld [smem:[#allocation0]]
  $region26: #{tpu_custom_call.1} parent=0
    _
  %s5 = ssub.s32 1, %s3
  %s6 = scalar_select 0, %s5, %s3
  $region1: #{tpu_custom_call.1} parent=0
    #allocation2 [shape = 'u8[8192]{0}', space=vmem, size = 0x2000, scoped, tag = 'input window, operand 0, single buffered']
    #allocation3 [shape = 's32[1]{0}', space=sflag, size = 0x4, scoped, tag = 'scoped memory for tpu_custom_call.1']
    #allocation4 [shape = 's32[1]{0}', space=sflag, size = 0x4, scoped, tag = 'scoped memory for tpu_custom_call.1']
    #allocation5 [shape = 'u8[8192]{0}', space=vmem, size = 0x2000, scoped, tag = 'input window, operand 1, single buffered']
    #allocation6 [shape = 's32[1]{0}', space=sflag, size = 0x4, scoped, tag = 'scoped memory for tpu_custom_call.1']
    #allocation7 [shape = 'u8[8192]{0}', space=vmem, size = 0x2000, scoped, tag = 'output window, operand 0, single buffered']
    %7 = vsyncpa [#allocation3], 0
    %8 = vsyncpa [#allocation6], 0
    %9 = vsyncpa [#allocation4], 0
    // Predicated region
    $region2: #{tpu_custom_call.1} parent=1 // pred_check
      _
    $region3: #{tpu_custom_call.1} parent=1 // pred_check_branch
      %11 = sbr.rel (0) target = $region5
    $region4: #{tpu_custom_call.1} parent=1 // pred_region
      %s13 = ssub.s32 256, 256
      %14 = vsyncadd [#allocation3], %s13
      %s15 = sshll.u32 [#allocation2], 4
      %s16 = int_to_ptr.vmem [resolvable:$true] %s15
      %21 = dma.hbm_to_vmem [thread:$0]  %s0, 256, %s16, [#allocation3], 128, 128, 8
    $region5: #{tpu_custom_call.1} parent=1 // pred_fallthru
      _
    // Predicated region
    $region6: #{tpu_custom_call.1} parent=1 // pred_check
      _
    $region7: #{tpu_custom_call.1} parent=1 // pred_check_branch
      %23 = sbr.rel (0) target = $region9
    $region8: #{tpu_custom_call.1} parent=1 // pred_region
      %s25 = ssub.s32 256, 256
      %26 = vsyncadd [#allocation6], %s25
      %s27 = sshll.u32 [#allocation5], 4
      %s28 = int_to_ptr.vmem [resolvable:$true] %s27
      %33 = dma.hbm_to_vmem [thread:$0]  %s1, 256, %s28, [#allocation6], 128, 128, 8
    $region9: #{tpu_custom_call.1} parent=1 // pred_fallthru
      _
    // Predicated region
    $region10: #{tpu_custom_call.1} parent=1 // pred_check
      _
    $region11: #{tpu_custom_call.1} parent=1 // pred_check_branch
      %35 = sbr.rel (0) target = $region13
    $region12: #{tpu_custom_call.1} parent=1 // pred_region
      %36 = dma.done [#allocation3], 256
    $region13: #{tpu_custom_call.1} parent=1 // pred_fallthru
      _
    // Predicated region
    $region14: #{tpu_custom_call.1} parent=1 // pred_check
      _
    $region15: #{tpu_custom_call.1} parent=1 // pred_check_branch
      %38 = sbr.rel (0) target = $region17
    $region16: #{tpu_custom_call.1} parent=1 // pred_region
      %39 = dma.done [#allocation6], 256
    $region17: #{tpu_custom_call.1} parent=1 // pred_fallthru
      _
    %v40 = vld [vmem:[#allocation2] sm:$0xff]
    %v41 = vld [vmem:[#allocation2 + $0x8] sm:$0xff]
    %v42 = vld [vmem:[#allocation5] sm:$0xff]
    %v43 = vld [vmem:[#allocation5 + $0x8] sm:$0xff]
    %v44 = vmax.f32 %v40, %v42
    %v45 = vmax.f32 %v41, %v43
    %46 = vst [vmem:[#allocation7] sm:$0xff] %v44
    %47 = vst [vmem:[#allocation7 + $0x8] sm:$0xff] %v45
    // Predicated region
    $region18: #{tpu_custom_call.1} parent=1 // pred_check
      _
    $region19: #{tpu_custom_call.1} parent=1 // pred_check_branch
      %49 = sbr.rel (0) target = $region21
    $region20: #{tpu_custom_call.1} parent=1 // pred_region
      %s51 = ssub.s32 256, 256
      %52 = vsyncadd [#allocation4], %s51
      %s53 = sshll.u32 [#allocation7], 4
      %s54 = int_to_ptr.vmem [resolvable:$true] %s53
      %59 = dma.vmem_to_hbm [thread:$0]  %s54, 256, %s2, [#allocation4], 128, 128, 8
    $region21: #{tpu_custom_call.1} parent=1 // pred_fallthru
      _
    // Predicated region
    $region22: #{tpu_custom_call.1} parent=1 // pred_check
      _
    $region23: #{tpu_custom_call.1} parent=1 // pred_check_branch
      %61 = sbr.rel (0) target = $region25
    $region24: #{tpu_custom_call.1} parent=1 // pred_region
      %62 = dma.done [#allocation4], 256
    $region25: #{tpu_custom_call.1} parent=1 // pred_fallthru
      _
    %63 = vsyncpa [#allocation3], 1
    %64 = vsyncpa [#allocation6], 1
    %65 = vsyncpa [#allocation4], 1

</llo_original>
